<compile_context>
chip_gen: v7x
topology: tpu7x:2x2x1
jax: 0.10.0
libtpu: 0.0.40
codegen_flags: <defaults>
</compile_context>

<pallas_src>
from functools import partial

import jax
import jax.numpy as jnp
from jax import lax
from jax.experimental import pallas as pl
from jax.experimental.pallas import tpu as pltpu


def _layernorm_kernel(x_ref, g_ref, o_ref, *, eps, inv_c):
    # x_ref: (BB, C, TL), g_ref: (1, C, 1), o_ref: (BB, C, TL)
    x = x_ref[...].astype(jnp.float32)
    # Single-pass stats over the channel (sublane) axis: two independent
    # XLU reductions, no second VALU pass over the tile.
    s1 = jnp.sum(x, axis=1, keepdims=True)          # (BB, 1, TL)
    s2 = jnp.sum(x * x, axis=1, keepdims=True)      # (BB, 1, TL)
    mean = s1 * inv_c
    var = s2 * inv_c - mean * mean                  # unbiased=False
    g = g_ref[...].astype(jnp.float32)              # (1, C, 1), VMEM-resident
    y = (x - mean) * lax.rsqrt(var + eps) * g
    o_ref[...] = y.astype(o_ref.dtype)


def _choose_tiles(B, C, L):
    """Pick (BB, TL) so one block is ~<=2 MiB of f32 and lane-dense."""
    budget_elems = 512 * 1024  # f32 elements per block (~2 MiB)
    if L % 128 == 0:
        TL = min(L, 1024)                                    # multiple of 128
        max_tl = max(128, (budget_elems // max(C, 1)) // 128 * 128)
        TL = min(TL, max_tl)
    else:
        # Full lane extent: block dim == array dim is always a legal block.
        TL = L
    # Pack several batches per block when C*TL is small (amortize ~0.35us/step).
    BB = max(1, min(B, budget_elems // max(C * TL, 1)))
    return BB, TL


def layer_norm(x, g):
    """LayerNorm over channel dim (axis=1) of a (B, C, L) tensor."""
    B, C, L = x.shape
    assert g.shape == (1, C, 1)
    # PyTorch module: eps = 1e-5 if float32 else 1e-3
    eps = 1e-05 if x.dtype == jnp.float32 else 1e-03

    BB, TL = _choose_tiles(B, C, L)
    kernel = partial(_layernorm_kernel, eps=eps, inv_c=1.0 / C)

    return pl.pallas_call(
        kernel,
        out_shape=jax.ShapeDtypeStruct((B, C, L), x.dtype),
        grid=(pl.cdiv(B, BB), pl.cdiv(L, TL)),
        in_specs=[
            pl.BlockSpec((BB, C, TL), lambda b, l: (b, 0, l)),
            pl.BlockSpec((1, C, 1), lambda b, l: (0, 0, 0)),
        ],
        out_specs=pl.BlockSpec((BB, C, TL), lambda b, l: (b, 0, l)),
        compiler_params=pltpu.CompilerParams(
            dimension_semantics=("parallel", "parallel"),
            vmem_limit_bytes=48 * 1024 * 1024,
        ),
    )(x, g)


def _reference(x, g):
    eps = 1e-05 if x.dtype == jnp.float32 else 1e-03
    xf = x.astype(jnp.float32)
    mean = jnp.mean(xf, axis=1, keepdims=True)
    var = jnp.mean((xf - mean) ** 2, axis=1, keepdims=True)
    y = (xf - mean) * lax.rsqrt(var + eps) * g.astype(jnp.float32)
    return y.astype(x.dtype)


if __name__ == "__main__":
    key = jax.random.PRNGKey(0)

    # Primary shape from the module's NCL layout.
    B, C, L = 2, 32, 128
    x = jax.random.normal(key, (B, C, L), dtype=jnp.float32)
    # Deterministic parameter init matching nn.Parameter(torch.ones(1, dim, 1))
    g = jnp.ones((1, C, 1), dtype=jnp.float32)

    out = jax.block_until_ready(layer_norm(x, g))
    ref = _reference(x, g)
    assert out.shape == (B, C, L)
    assert jnp.allclose(out, ref, atol=1e-5, rtol=1e-5), "mismatch vs reference"

    # Exercise the L-tiled path (grid with >1 lane tile) at a small shape.
    B2, C2, L2 = 1, 8, 2048
    key2 = jax.random.PRNGKey(0)
    x2 = jax.random.normal(key2, (B2, C2, L2), dtype=jnp.float32)
    g2 = jnp.ones((1, C2, 1), dtype=jnp.float32)
    out2 = jax.block_until_ready(layer_norm(x2, g2))
    ref2 = _reference(x2, g2)
    assert jnp.allclose(out2, ref2, atol=1e-5, rtol=1e-5), "mismatch vs reference (tiled)"

    print("KERNEL_OK")
</pallas_src>

<mosaic_0001>
module attributes {stable_mosaic.version = 11 : i64} {
  func.func @_layernorm_kernel(%arg0: i32, %arg1: i32, %arg2: memref<2x32x128xf32, #tpu.memory_space<vmem>>, %arg3: memref<1x32x1xf32, #tpu.memory_space<vmem>>, %arg4: memref<2x32x128xf32, #tpu.memory_space<vmem>>) attributes {dimension_semantics = [#tpu.dimension_semantics<parallel>, #tpu.dimension_semantics<parallel>], iteration_bounds = array<i64: 1, 1>, scalar_prefetch = 0 : i64, scratch_operands = 0 : i64, tpu.core_type = #tpu.core_type<tc>, window_params = [{transform_indices = @transform_0, window_bounds = array<i64: 2, 32, 128>}, {pipeline_mode = #tpu.pipeline_mode<synchronous>, transform_indices = @transform_1, window_bounds = array<i64: 1, 32, 1>}, {transform_indices = @transform_2, window_bounds = array<i64: 2, 32, 128>}]} {
    %c0 = arith.constant 0 : index
    %c0_0 = arith.constant 0 : index
    %c0_1 = arith.constant 0 : index
    %0 = vector.load %arg2[%c0, %c0_0, %c0_1] : memref<2x32x128xf32, #tpu.memory_space<vmem>>, vector<2x32x128xf32>
    %cst = arith.constant dense<0.000000e+00> : vector<2x128xf32>
    %1 = vector.multi_reduction <add>, %0, %cst [1] : vector<2x32x128xf32> to vector<2x128xf32>
    %2 = vector.shape_cast %1 : vector<2x128xf32> to vector<2x1x128xf32>
    %3 = arith.mulf %0, %0 : vector<2x32x128xf32>
    %cst_2 = arith.constant dense<0.000000e+00> : vector<2x128xf32>
    %4 = vector.multi_reduction <add>, %3, %cst_2 [1] : vector<2x32x128xf32> to vector<2x128xf32>
    %5 = vector.shape_cast %4 : vector<2x128xf32> to vector<2x1x128xf32>
    %cst_3 = arith.constant 3.125000e-02 : f32
    %6 = vector.broadcast %cst_3 : f32 to vector<2x1x128xf32>
    %7 = arith.mulf %2, %6 : vector<2x1x128xf32>
    %cst_4 = arith.constant 3.125000e-02 : f32
    %8 = vector.broadcast %cst_4 : f32 to vector<2x1x128xf32>
    %9 = arith.mulf %5, %8 : vector<2x1x128xf32>
    %10 = arith.mulf %7, %7 : vector<2x1x128xf32>
    %11 = arith.subf %9, %10 : vector<2x1x128xf32>
    %c0_5 = arith.constant 0 : index
    %c0_6 = arith.constant 0 : index
    %c0_7 = arith.constant 0 : index
    %12 = vector.load %arg3[%c0_5, %c0_6, %c0_7] : memref<1x32x1xf32, #tpu.memory_space<vmem>>, vector<1x32x1xf32>
    %13 = vector.broadcast %7 : vector<2x1x128xf32> to vector<2x32x128xf32>
    %14 = arith.subf %0, %13 : vector<2x32x128xf32>
    %cst_8 = arith.constant 9.99999974E-6 : f32
    %15 = vector.broadcast %cst_8 : f32 to vector<2x1x128xf32>
    %16 = arith.addf %11, %15 : vector<2x1x128xf32>
    %17 = math.rsqrt %16 : vector<2x1x128xf32>
    %18 = vector.broadcast %17 : vector<2x1x128xf32> to vector<2x32x128xf32>
    %19 = arith.mulf %14, %18 : vector<2x32x128xf32>
    %20 = vector.broadcast %12 : vector<1x32x1xf32> to vector<2x32x128xf32>
    %21 = arith.mulf %19, %20 : vector<2x32x128xf32>
    %c0_9 = arith.constant 0 : index
    %c0_10 = arith.constant 0 : index
    %c0_11 = arith.constant 0 : index
    %22 = vector.load %arg4[%c0_9, %c0_10, %c0_11] : memref<2x32x128xf32, #tpu.memory_space<vmem>>, vector<2x32x128xf32>
    tpu.vector_store %arg4[%c0_9, %c0_10, %c0_11], %21 {strides = array<i32>} : memref<2x32x128xf32, #tpu.memory_space<vmem>>, vector<2x32x128xf32>,
    return
  }
  func.func @transform_0(%arg0: i32, %arg1: i32) -> (i32, i32, i32) {
    %c0_i32 = arith.constant 0 : i32
    %c0_i32_0 = arith.constant 0 : i32
    return %arg0, %c0_i32, %arg1 : i32, i32, i32
  }
  func.func @transform_1(%arg0: i32, %arg1: i32) -> (i32, i32, i32) {
    %c0_i32 = arith.constant 0 : i32
    %c0_i32_0 = arith.constant 0 : i32
    %c0_i32_1 = arith.constant 0 : i32
    %c0_i32_2 = arith.constant 0 : i32
    return %c0_i32, %c0_i32_0, %c0_i32_1 : i32, i32, i32
  }
  func.func @transform_2(%arg0: i32, %arg1: i32) -> (i32, i32, i32) {
    %c0_i32 = arith.constant 0 : i32
    %c0_i32_0 = arith.constant 0 : i32
    return %arg0, %c0_i32, %arg1 : i32, i32, i32
  }
}

</mosaic_0001>

<llo_original>
// kernel: tpu_custom_call.1
$region0: #{tpu_custom_call.1}
  #allocation0 [shape = 'u32[]', space=smem, size = 0x4, offset = 0x4, fixed_abs, tag = 'smem constant byte address 0x4 - core index']
  #allocation1 [shape = 'u32[144,128]{1,0:T(1,128)}', space=vmem, size = 0x12000, scoped, tag = 'internal scratch']
  %s0 = inlined_call_operand.hbm [shape: f32[2,32,128], index: 0, kind: input, shape index: {}]
  %s1 = inlined_call_operand.vmem [shape: f32[1,32,1], index: 1, kind: input, shape index: {}]
  %s2 = inlined_call_operand.hbm [shape: f32[2,32,128], index: 2, kind: output, shape index: {}]
  %s3 = sld [smem:[#allocation0]]
  $region22: #{tpu_custom_call.1} parent=0
    _
  %s5 = ssub.s32 1, %s3
  %s6 = scalar_select 0, %s5, %s3
  $region1: #{tpu_custom_call.1} parent=0
    #allocation2 [shape = 'u8[32768]{0}', space=vmem, size = 0x8000, scoped, tag = 'input window, operand 0, single buffered']
    #allocation3 [shape = 's32[1]{0}', space=sflag, size = 0x4, scoped, tag = 'scoped memory for tpu_custom_call.1']
    #allocation4 [shape = 's32[1]{0}', space=sflag, size = 0x4, scoped, tag = 'scoped memory for tpu_custom_call.1']
    #allocation5 [shape = 'u8[32768]{0}', space=vmem, size = 0x8000, scoped, tag = 'output window, operand 0, single buffered']
    %7 = vsyncpa [#allocation3], 0
    %8 = vsyncpa [#allocation4], 0
    // Predicated region
    $region2: #{tpu_custom_call.1} parent=1 // pred_check
      _
    $region3: #{tpu_custom_call.1} parent=1 // pred_check_branch
      %10 = sbr.rel (0) target = $region5
    $region4: #{tpu_custom_call.1} parent=1 // pred_region
      %s12 = ssub.s32 1024, 1024
      %13 = vsyncadd [#allocation3], %s12
      %s14 = sshll.u32 [#allocation2], 4
      %s15 = int_to_ptr.vmem [resolvable:$true] %s14
      %20 = dma.hbm_to_vmem [thread:$0]  %s0, 1024, %s15, [#allocation3], 128, 128, 8
    $region5: #{tpu_custom_call.1} parent=1 // pred_fallthru
      _
    // Predicated region
    $region6: #{tpu_custom_call.1} parent=1 // pred_check
      _
    $region7: #{tpu_custom_call.1} parent=1 // pred_check_branch
      %22 = sbr.rel (0) target = $region9
    $region8: #{tpu_custom_call.1} parent=1 // pred_region
      _
    $region9: #{tpu_custom_call.1} parent=1 // pred_fallthru
      _
    // Predicated region
    $region10: #{tpu_custom_call.1} parent=1 // pred_check
      _
    $region11: #{tpu_custom_call.1} parent=1 // pred_check_branch
      %24 = sbr.rel (0) target = $region13
    $region12: #{tpu_custom_call.1} parent=1 // pred_region
      %25 = dma.done [#allocation3], 1024
    $region13: #{tpu_custom_call.1} parent=1 // pred_fallthru
      _
    %v26 = vld [vmem:[#allocation2] sm:$0xff]
    %v27 = vld [vmem:[#allocation2 + $0x8] sm:$0xff]
    %v28 = vld [vmem:[#allocation2 + $0x10] sm:$0xff]
    %v29 = vld [vmem:[#allocation2 + $0x18] sm:$0xff]
    %v30 = vld [vmem:[#allocation2 + $0x20] sm:$0xff]
    %v31 = vld [vmem:[#allocation2 + $0x28] sm:$0xff]
    %v32 = vld [vmem:[#allocation2 + $0x30] sm:$0xff]
    %v33 = vld [vmem:[#allocation2 + $0x38] sm:$0xff]
    %v34 = vadd.f32 %v26, %v27
    %v35 = vadd.f32 %v34, %v28
    %v36 = vadd.f32 %v35, %v29
    %v37 = vrot.slane %v36, 4
    %v38 = vadd.f32 %v36, %v37
    %v39 = vrot.slane %v38, 2
    %v40 = vadd.f32 %v38, %v39
    %v41 = vrot.slane %v40, 1
    %v42 = vadd.f32 %v40, %v41
    %v43 = vadd.f32 %v30, %v31
    %v44 = vadd.f32 %v43, %v32
    %v45 = vadd.f32 %v44, %v33
    %v46 = vrot.slane %v45, 4
    %v47 = vadd.f32 %v45, %v46
    %v48 = vrot.slane %v47, 2
    %v49 = vadd.f32 %v47, %v48
    %v50 = vrot.slane %v49, 1
    %v51 = vadd.f32 %v49, %v50
    %v52 = vmul.f32 %v26, %v26
    %v53 = vmul.f32 %v27, %v27
    %v54 = vmul.f32 %v28, %v28
    %v55 = vmul.f32 %v29, %v29
    %v56 = vmul.f32 %v30, %v30
    %v57 = vmul.f32 %v31, %v31
    %v58 = vmul.f32 %v32, %v32
    %v59 = vmul.f32 %v33, %v33
    %v60 = vadd.f32 %v52, %v53
    %v61 = vadd.f32 %v60, %v54
    %v62 = vadd.f32 %v61, %v55
    %v63 = vrot.slane %v62, 4
    %v64 = vadd.f32 %v62, %v63
    %v65 = vrot.slane %v64, 2
    %v66 = vadd.f32 %v64, %v65
    %v67 = vrot.slane %v66, 1
    %v68 = vadd.f32 %v66, %v67
    %v69 = vadd.f32 %v56, %v57
    %v70 = vadd.f32 %v69, %v58
    %v71 = vadd.f32 %v70, %v59
    %v72 = vrot.slane %v71, 4
    %v73 = vadd.f32 %v71, %v72
    %v74 = vrot.slane %v73, 2
    %v75 = vadd.f32 %v73, %v74
    %v76 = vrot.slane %v75, 1
    %v77 = vadd.f32 %v75, %v76
    %v78 = vmul.f32 %v42, 0.03125
    %v79 = vmul.f32 %v51, 0.03125
    %v80 = vmul.f32 %v68, 0.03125
    %v81 = vmul.f32 %v77, 0.03125
    %v82 = vmul.f32 %v78, %v78
    %v83 = vmul.f32 %v79, %v79
    %v84 = vsub.f32 %v80, %v82
    %v85 = vsub.f32 %v81, %v83
    %v86 = vld [vmem:[%s1] sm:$0xff]
    %v87 = vld [vmem:[%s1 + $0x8] sm:$0xff]
    %v88 = vld [vmem:[%s1 + $0x10] sm:$0xff]
    %v89 = vld [vmem:[%s1 + $0x18] sm:$0xff]
    %v90 = vsub.f32 %v26, %v78
    %v91 = vsub.f32 %v27, %v78
    %v92 = vsub.f32 %v28, %v78
    %v93 = vsub.f32 %v29, %v78
    %v94 = vsub.f32 %v30, %v79
    %v95 = vsub.f32 %v31, %v79
    %v96 = vsub.f32 %v32, %v79
    %v97 = vsub.f32 %v33, %v79
    %v98 = vadd.f32 %v84, 1e-05
    %v99 = vadd.f32 %v85, 1e-05
    %v100 = vrsqrt.pop %v98
    %v101 = vrsqrt.pop %v99
    %v102 = vmul.f32 %v90, %v100
    %v103 = vmul.f32 %v91, %v100
    %v104 = vmul.f32 %v92, %v100
    %v105 = vmul.f32 %v93, %v100
    %v106 = vmul.f32 %v94, %v101
    %v107 = vmul.f32 %v95, %v101
    %v108 = vmul.f32 %v96, %v101
    %v109 = vmul.f32 %v97, %v101
    %111 = vset.pattern.permute.xlu0 0
    %112 = vperm.xlu0 %111, %v86
    %v113 = vpop.permute.xlu0 %112
    %116 = vset.pattern.permute.xlu0 0
    %117 = vperm.xlu0 %116, %v87
    %v118 = vpop.permute.xlu0 %117
    %121 = vset.pattern.permute.xlu0 0
    %122 = vperm.xlu0 %121, %v88
    %v123 = vpop.permute.xlu0 %122
    %126 = vset.pattern.permute.xlu0 0
    %127 = vperm.xlu0 %126, %v89
    %v128 = vpop.permute.xlu0 %127
    %v130 = vmul.f32 %v102, %v113
    %v131 = vmul.f32 %v103, %v118
    %v132 = vmul.f32 %v104, %v123
    %v133 = vmul.f32 %v105, %v128
    %v134 = vmul.f32 %v106, %v113
    %v135 = vmul.f32 %v107, %v118
    %v136 = vmul.f32 %v108, %v123
    %v137 = vmul.f32 %v109, %v128
    %138 = vst [vmem:[#allocation5] sm:$0xff] %v130
    %139 = vst [vmem:[#allocation5 + $0x8] sm:$0xff] %v131
    %140 = vst [vmem:[#allocation5 + $0x10] sm:$0xff] %v132
    %141 = vst [vmem:[#allocation5 + $0x18] sm:$0xff] %v133
    %142 = vst [vmem:[#allocation5 + $0x20] sm:$0xff] %v134
    %143 = vst [vmem:[#allocation5 + $0x28] sm:$0xff] %v135
    %144 = vst [vmem:[#allocation5 + $0x30] sm:$0xff] %v136
    %145 = vst [vmem:[#allocation5 + $0x38] sm:$0xff] %v137
    // Predicated region
    $region14: #{tpu_custom_call.1} parent=1 // pred_check
      _
    $region15: #{tpu_custom_call.1} parent=1 // pred_check_branch
      %147 = sbr.rel (0) target = $region17
    $region16: #{tpu_custom_call.1} parent=1 // pred_region
      %s149 = ssub.s32 1024, 1024
      %150 = vsyncadd [#allocation4], %s149
      %s151 = sshll.u32 [#allocation5], 4
      %s152 = int_to_ptr.vmem [resolvable:$true] %s151
      %157 = dma.vmem_to_hbm [thread:$0]  %s152, 1024, %s2, [#allocation4], 128, 128, 8
    $region17: #{tpu_custom_call.1} parent=1 // pred_fallthru
      _
    // Predicated region
    $region18: #{tpu_custom_call.1} parent=1 // pred_check
      _
    $region19: #{tpu_custom_call.1} parent=1 // pred_check_branch
      %159 = sbr.rel (0) target = $region21
    $region20: #{tpu_custom_call.1} parent=1 // pred_region
      %160 = dma.done [#allocation4], 1024
    $region21: #{tpu_custom_call.1} parent=1 // pred_fallthru
      _
    %161 = vsyncpa [#allocation3], 1
    %162 = vsyncpa [#allocation4], 1

</llo_original>
